<compile_context>
chip_gen: v6e
topology: v6e:2x2x1
jax: 0.10.0
libtpu: 0.0.40
codegen_flags: <defaults>
</compile_context>

<pallas_src>
import random

import jax
import jax.numpy as jnp
from jax.experimental import pallas as pl
from jax.experimental.pallas import tpu as pltpu


# --------------------------------------------------------------------------- #
# Kernel: lane-dense elementwise mix  out = x + (x_copy - x) * (1 - lambda)
# --------------------------------------------------------------------------- #
def _efdmix_mix_kernel(w_ref, x_ref, xc_ref, o_ref):
    # w_ref : SMEM (B,)            float32  (1 - lambda) per sample (scalar prefetch)
    # x_ref : VMEM (c_blk, n_blk)  block of x[b]
    # xc_ref: VMEM (c_blk, n_blk)  block of the rank-matched copy x_copy[b]
    # o_ref : VMEM (c_blk, n_blk)  output block (lane-dense store)
    w = w_ref[pl.program_id(0)]                 # top-level only (interpret-safe)
    x = x_ref[...].astype(jnp.float32)
    xc = xc_ref[...].astype(jnp.float32)
    o_ref[...] = (x + (xc - x) * w).astype(o_ref.dtype)


# --------------------------------------------------------------------------- #
# Tiling / wrapper
# --------------------------------------------------------------------------- #
def _choose_tiles(C, N, itemsize, per_array_budget=4 * 1024 * 1024):
    """Pick (c_blk, n_blk) obeying the (8,128) block rule with a VMEM budget.

    Three arrays (x, x_copy, out) are double-buffered, so live VMEM is roughly
    6 * c_blk * n_blk * itemsize; a 4 MiB per-array budget keeps that well
    under 32 MiB of scoped VMEM on every generation (incl. v7x, 64 MiB/TC).
    """
    row_bytes = N * itemsize

    # Channel (sublane) block: full C, or a multiple-of-8 divisor of C.
    if C * row_bytes <= per_array_budget or C % 8 != 0:
        c_blk = C
    else:
        c_blk = 8
        d = 16
        while d <= C:
            if C % d == 0 and d * row_bytes <= per_array_budget:
                c_blk = d
            d += 8

    # Spatial (lane) block: full N, or a multiple-of-128 divisor of N.
    n_blk = N
    if N % 128 == 0 and c_blk * row_bytes > per_array_budget:
        n_blk = 128
        d = 256
        while d <= N:
            if N % d == 0 and c_blk * d * itemsize <= per_array_budget:
                n_blk = d
            d += 128
    return c_blk, n_blk


def efdmix_pallas(x, perm, lmda):
    """EFDMix mixing.  x: (B, C, W, H); perm: (B,) int32; lmda: (B,) float32."""
    B, C, W, H = x.shape
    N = W * H
    xv = x.reshape(B, C, N)

    # Exact rank-matched gather, hoisted to XLA (sort / argsort / per-element
    # gather along the lane axis have no efficient Pallas TPU equivalent).
    value_x = jnp.sort(xv, axis=-1)
    inverse_index = jnp.argsort(jnp.argsort(xv, axis=-1), axis=-1)
    x_copy = jnp.take_along_axis(value_x[perm], inverse_index, axis=-1)

    # Per-sample mixing weight (1 - lambda), scalar-prefetched into SMEM.
    w = (1.0 - lmda.astype(jnp.float32)).reshape(B)

    itemsize = jnp.dtype(x.dtype).itemsize
    c_blk, n_blk = _choose_tiles(C, N, itemsize)
    grid = (B, C // c_blk, N // n_blk)

    block_bytes = c_blk * n_blk * itemsize
    need = 2 * 3 * block_bytes + (1 << 20)       # 3 arrays, double-buffered, + slack
    vmem_limit = int(min(40 << 20, max(32 << 20, need)))

    # Same block/index_map for both inputs and the output (prefetch ref is the
    # trailing positional arg of every index_map).
    spec = pl.BlockSpec((None, c_blk, n_blk), lambda b, c, n, w_ref: (b, c, n))

    out = pl.pallas_call(
        _efdmix_mix_kernel,
        out_shape=jax.ShapeDtypeStruct((B, C, N), x.dtype),
        grid_spec=pltpu.PrefetchScalarGridSpec(
            num_scalar_prefetch=1,
            grid=grid,
            in_specs=[spec, spec],
            out_specs=spec,
        ),
        compiler_params=pltpu.CompilerParams(
            dimension_semantics=("parallel", "parallel", "parallel"),
            vmem_limit_bytes=vmem_limit,
        ),
    )(w, xv, x_copy)
    return out.reshape(B, C, W, H)


# --------------------------------------------------------------------------- #
# Full module forward (randomness glue) and plain-JAX reference
# --------------------------------------------------------------------------- #
def efdmix_forward(x, key, p=0.5, alpha=0.1, mix="random", training=True):
    """Full EFDMix forward.  The probability gate uses host-side randomness,
    mirroring random.random() in the PyTorch module.
    NOTE: under jax.jit this gate becomes a trace-time constant."""
    if not training:
        return x
    if random.random() > p:
        return x
    B = x.shape[0]
    k_beta, k_perm = jax.random.split(key)
    lmda = jax.random.beta(k_beta, alpha, alpha, shape=(B,)).astype(jnp.float32)
    if mix == "random":
        perm = jax.random.permutation(k_perm, B)
    elif mix == "crossdomain":
        perm = jnp.arange(B - 1, -1, -1)
        half = (B + 1) // 2
        kb, ka = jax.random.split(k_perm)
        perm_b = jax.random.permutation(kb, perm[:half])
        perm_a = jax.random.permutation(ka, perm[half:])
        perm = jnp.concatenate([perm_b, perm_a], 0)
    else:
        raise NotImplementedError
    return efdmix_pallas(x, perm.astype(jnp.int32), lmda)


def efdmix_reference(x, perm, lmda):
    """Plain-JAX reference mirroring the PyTorch forward (for validation)."""
    B, C, W, H = x.shape
    xv = x.reshape(B, C, -1)
    value_x = jnp.sort(xv, axis=-1)
    index_x = jnp.argsort(xv, axis=-1)
    inverse_index = jnp.argsort(index_x, axis=-1)
    x_copy = jnp.take_along_axis(value_x[perm], inverse_index, axis=-1)
    lam = lmda.reshape(B, 1, 1)
    out = xv + (x_copy - xv) * (1.0 - lam)
    return out.reshape(B, C, W, H)


if __name__ == "__main__":
    random.seed(0)
    key = jax.random.PRNGKey(0)
    kx, k_beta, k_perm = jax.random.split(key, 3)

    B, C, W, H = 2, 4, 16, 16
    x = jax.random.normal(kx, (B, C, W, H), dtype=jnp.float32)

    # Deterministic randomness for the mix (shared by kernel and reference).
    lmda = jax.random.beta(k_beta, 0.1, 0.1, shape=(B,)).astype(jnp.float32)
    perm = jax.random.permutation(k_perm, B).astype(jnp.int32)

    out = jax.block_until_ready(efdmix_pallas(x, perm, lmda))
    ref = efdmix_reference(x, perm, lmda)

    assert out.shape == x.shape and out.dtype == x.dtype
    max_err = float(jnp.max(jnp.abs(out - ref)))
    assert max_err <= 1e-5, f"max_err={max_err}"

    # Exercise the full module forward (host p-gate, Beta, permutation).
    _ = jax.block_until_ready(efdmix_forward(x, jax.random.PRNGKey(1), p=1.0))

    print("KERNEL_OK")
</pallas_src>

<mosaic_0001>
module attributes {stable_mosaic.version = 11 : i64} {
  func.func @_efdmix_mix_kernel(%arg0: i32, %arg1: i32, %arg2: i32, %arg3: memref<2xf32, #tpu.memory_space<smem>>, %arg4: memref<1x4x256xf32, #tpu.memory_space<vmem>>, %arg5: memref<1x4x256xf32, #tpu.memory_space<vmem>>, %arg6: memref<1x4x256xf32, #tpu.memory_space<vmem>>) attributes {dimension_semantics = [#tpu.dimension_semantics<parallel>, #tpu.dimension_semantics<parallel>, #tpu.dimension_semantics<parallel>], iteration_bounds = array<i64: 2, 1, 1>, scalar_prefetch = 1 : i64, scratch_operands = 0 : i64, tpu.core_type = #tpu.core_type<tc>, window_params = [{transform_indices = @transform_0, window_bounds = array<i64: 1, 4, 256>}, {transform_indices = @transform_1, window_bounds = array<i64: 1, 4, 256>}, {transform_indices = @transform_2, window_bounds = array<i64: 1, 4, 256>}]} {
    %0 = arith.index_cast %arg0 : i32 to index
    %1 = memref.load %arg3[%0] : memref<2xf32, #tpu.memory_space<smem>>
    %c0 = arith.constant 0 : index
    %c0_0 = arith.constant 0 : index
    %c0_1 = arith.constant 0 : index
    %2 = vector.load %arg4[%c0, %c0_0, %c0_1] : memref<1x4x256xf32, #tpu.memory_space<vmem>>, vector<1x4x256xf32>
    %3 = vector.shape_cast %2 : vector<1x4x256xf32> to vector<4x256xf32>
    %c0_2 = arith.constant 0 : index
    %c0_3 = arith.constant 0 : index
    %c0_4 = arith.constant 0 : index
    %4 = vector.load %arg5[%c0_2, %c0_3, %c0_4] : memref<1x4x256xf32, #tpu.memory_space<vmem>>, vector<1x4x256xf32>
    %5 = vector.shape_cast %4 : vector<1x4x256xf32> to vector<4x256xf32>
    %6 = arith.subf %5, %3 : vector<4x256xf32>
    %7 = vector.broadcast %1 : f32 to vector<4x256xf32>
    %8 = arith.mulf %6, %7 : vector<4x256xf32>
    %9 = arith.addf %3, %8 : vector<4x256xf32>
    %c0_5 = arith.constant 0 : index
    %c0_6 = arith.constant 0 : index
    %c0_7 = arith.constant 0 : index
    %10 = vector.load %arg6[%c0_5, %c0_6, %c0_7] : memref<1x4x256xf32, #tpu.memory_space<vmem>>, vector<1x4x256xf32>
    %11 = vector.shape_cast %10 : vector<1x4x256xf32> to vector<4x256xf32>
    %12 = vector.shape_cast %9 : vector<4x256xf32> to vector<1x4x256xf32>
    tpu.vector_store %arg6[%c0_5, %c0_6, %c0_7], %12 {strides = array<i32>} : memref<1x4x256xf32, #tpu.memory_space<vmem>>, vector<1x4x256xf32>,
    return
  }
  func.func @transform_0(%arg0: i32, %arg1: i32, %arg2: i32, %arg3: memref<2xf32, #tpu.memory_space<smem>>) -> (i32, i32, i32) {
    %c0_i32 = arith.constant 0 : i32
    return %arg0, %arg1, %arg2 : i32, i32, i32
  }
  func.func @transform_1(%arg0: i32, %arg1: i32, %arg2: i32, %arg3: memref<2xf32, #tpu.memory_space<smem>>) -> (i32, i32, i32) {
    %c0_i32 = arith.constant 0 : i32
    return %arg0, %arg1, %arg2 : i32, i32, i32
  }
  func.func @transform_2(%arg0: i32, %arg1: i32, %arg2: i32, %arg3: memref<2xf32, #tpu.memory_space<smem>>) -> (i32, i32, i32) {
    %c0_i32 = arith.constant 0 : i32
    return %arg0, %arg1, %arg2 : i32, i32, i32
  }
}

</mosaic_0001>

<llo_original>
// kernel: tpu_custom_call.1
$region0: #{tpu_custom_call.1}
  #allocation0 [shape = 'u32[]', space=smem, size = 0x4, offset = 0x4, fixed_abs, tag = 'smem constant byte address 0x4 - core index']
  #allocation1 [shape = 'u32[144,128]{1,0:T(1,128)}', space=vmem, size = 0x12000, scoped, tag = 'internal scratch']
  #allocation2 [shape = 's32[1]{0}', space=sflag, size = 0x4, scoped, tag = 'scoped memory for tpu_custom_call.1']
  #allocation3 [shape = 'u8[512]{0}', space=smem, size = 0x200, scoped, tag = 'prefetched SMEM operand 0']
  %s0 = inlined_call_operand.hbm [shape: f32[2], index: 0, kind: input, shape index: {}]
  %s1 = inlined_call_operand.hbm [shape: f32[2,4,256], index: 1, kind: input, shape index: {}]
  %s2 = inlined_call_operand.hbm [shape: f32[2,4,256], index: 2, kind: input, shape index: {}]
  %s3 = inlined_call_operand.hbm [shape: f32[2,4,256], index: 3, kind: output, shape index: {}]
  %s4 = sld [smem:[#allocation0]]
  $region49: #{tpu_custom_call.1} parent=0
    _
  %s6 = ssub.s32 1, %s4
  %s7 = scalar_select 0, %s6, %s4
  %9 = dma.hbm_to_smem %s0, 16, [#allocation3], [#allocation2]
  %10 = dma.done [#allocation2], 16
  %11 = sfence
  $region1: #{tpu_custom_call.1} parent=0
    #allocation4 [shape = 'u8[8192]{0}', space=vmem, size = 0x2000, scoped, tag = 'input window, operand 1']
    #allocation5 [shape = 's32[2]{0}', space=sflag, size = 0x8, scoped, tag = 'scoped memory for tpu_custom_call.1']
    #allocation6 [shape = 's32[2]{0}', space=sflag, size = 0x8, scoped, tag = 'scoped memory for tpu_custom_call.1']
    #allocation7 [shape = 'u8[8192]{0}', space=vmem, size = 0x2000, scoped, tag = 'input window, operand 2']
    #allocation8 [shape = 's32[2]{0}', space=sflag, size = 0x8, scoped, tag = 'scoped memory for tpu_custom_call.1']
    #allocation9 [shape = 'u8[8192]{0}', space=vmem, size = 0x2000, scoped, tag = 'output window, operand 0']
    %12 = vsyncpa [#allocation5], 0
    %s13 = scalar_lea.sflag [#allocation5], 1
    %14 = vsyncpa %s13, 0
    %15 = vsyncpa [#allocation8], 0
    %s16 = scalar_lea.sflag [#allocation8], 1
    %17 = vsyncpa %s16, 0
    %18 = vsyncpa [#allocation6], 0
    %s19 = scalar_lea.sflag [#allocation6], 1
    %20 = vsyncpa %s19, 0
    loop: start=0, step=1, limit=4
    $region2: #{tpu_custom_call.1} parent=1 // loop_pre_header
      _
    $region3: #{tpu_custom_call.1} parent=1 // loop_header
      %s22 = sphi 0, %s26
      %p23 = scmp.ge.s32.totalorder %s22, 4
      %s29 = sphi 0, %s48
      %s30 = sphi 0, %s44
      %s31 = sphi 0, %s40
      %s32 = sphi 0, %s29
      %s33 = sphi 0, %s30
      %s34 = sphi 0, %s31
      %s35 = sphi 0, %s32
      %s36 = sphi 0, %s33
      %s37 = sphi 0, %s34
      %s55 = sphi 0, %s57
      %s58 = sphi 0, %s55
      %s59 = sphi 0, %s58
      %s75 = sphi 0, %s59
      %s85 = sphi 0, %s87
      %s88 = sphi 0, %s85
      %s89 = sphi 0, %s88
      %s105 = sphi 0, %s89
      %s115 = sphi 0, %s117
      %s118 = sphi 0, %s115
      %s119 = sphi 0, %s118
      %s135 = sphi 0, %s119
    $region4: #{tpu_custom_call.1} parent=1 // loop_header_branch
      %25 = sbr.rel (%p23) target = $region8
    $region5: #{tpu_custom_call.1} parent=1 // loop_body
      %s27 = ssub.s32 %s22, 1
      %s28 = ssub.s32 %s22, 2
      %s38 = sadd.s32 1, %s31
      %p39 = scmp.ge.s32.totalorder %s38, 1
      %s40 = scalar_select %p39, 0, %s38
      %s41 = sadd.s32 1, %s30
      %s42 = scalar_select %p39, %s41, %s30
      %p43 = scmp.ge.s32.totalorder %s42, 1
      %s44 = scalar_select %p43, 0, %s42
      %s45 = sadd.s32 1, %s29
      %s46 = scalar_select %p43, %s45, %s29
      %p47 = scmp.ge.s32.totalorder %s46, 2
      %s48 = scalar_select %p47, 0, %s46
      %s49 = ssub.s32 %s29, %s48
      %s50 = ssub.s32 %s30, %s44
      %s51 = sor.u32 %s49, %s50
      %s52 = ssub.s32 %s31, %s40
      %s53 = sor.u32 %s51, %s52
      %p54 = scmp.eq.s32.totalorder %s53, 0
      %s56 = sadd.s32 %s55, 1
      %s57 = scalar_select %p54, %s55, %s56
      %p60 = pneg %p54
      %p61 = scmp.eq.s32.totalorder %s22, 1
      %p62 = por %p60, %p61
      %p63 = scmp.ne.s32.totalorder %s55, %s58
      %p64 = scmp.eq.s32.totalorder %s22, 0
      %p65 = por %p63, %p64
      %p66 = scmp.ne.s32.totalorder %s55, %s58
      %p67 = scmp.eq.s32.totalorder %s27, 1
      %p68 = por %p66, %p67
      %p69 = scmp.ne.s32.totalorder %s58, %s59
      %p70 = scmp.eq.s32.totalorder %s27, 0
      %p71 = por %p69, %p70
      %p72 = scmp.ne.s32.totalorder %s58, %s59
      %p73 = scmp.eq.s32.totalorder %s28, 1
      %p74 = por %p72, %p73
      %p76 = scmp.ne.s32.totalorder %s59, %s75
      %p77 = scmp.eq.s32.totalorder %s28, 0
      %p78 = por %p76, %p77
      %s79 = ssub.s32 %s29, %s48
      %s80 = ssub.s32 %s30, %s44
      %s81 = sor.u32 %s79, %s80
      %s82 = ssub.s32 %s31, %s40
      %s83 = sor.u32 %s81, %s82
      %p84 = scmp.eq.s32.totalorder %s83, 0
      %s86 = sadd.s32 %s85, 1
      %s87 = scalar_select %p84, %s85, %s86
      %p90 = pneg %p84
      %p91 = scmp.eq.s32.totalorder %s22, 1
      %p92 = por %p90, %p91
      %p93 = scmp.ne.s32.totalorder %s85, %s88
      %p94 = scmp.eq.s32.totalorder %s22, 0
      %p95 = por %p93, %p94
      %p96 = scmp.ne.s32.totalorder %s85, %s88
      %p97 = scmp.eq.s32.totalorder %s27, 1
      %p98 = por %p96, %p97
      %p99 = scmp.ne.s32.totalorder %s88, %s89
      %p100 = scmp.eq.s32.totalorder %s27, 0
      %p101 = por %p99, %p100
      %p102 = scmp.ne.s32.totalorder %s88, %s89
      %p103 = scmp.eq.s32.totalorder %s28, 1
      %p104 = por %p102, %p103
      %p106 = scmp.ne.s32.totalorder %s89, %s105
      %p107 = scmp.eq.s32.totalorder %s28, 0
      %p108 = por %p106, %p107
      %s109 = ssub.s32 %s29, %s48
      %s110 = ssub.s32 %s30, %s44
      %s111 = sor.u32 %s109, %s110
      %s112 = ssub.s32 %s31, %s40
      %s113 = sor.u32 %s111, %s112
      %p114 = scmp.eq.s32.totalorder %s113, 0
      %s116 = sadd.s32 %s115, 1
      %s117 = scalar_select %p114, %s115, %s116
      %p120 = pneg %p114
      %p121 = scmp.eq.s32.totalorder %s22, 1
      %p122 = por %p120, %p121
      %p123 = scmp.ne.s32.totalorder %s115, %s118
      %p124 = scmp.eq.s32.totalorder %s22, 0
      %p125 = por %p123, %p124
      %p126 = scmp.ne.s32.totalorder %s115, %s118
      %p127 = scmp.eq.s32.totalorder %s27, 1
      %p128 = por %p126, %p127
      %p129 = scmp.ne.s32.totalorder %s118, %s119
      %p130 = scmp.eq.s32.totalorder %s27, 0
      %p131 = por %p129, %p130
      %p132 = scmp.ne.s32.totalorder %s118, %s119
      %p133 = scmp.eq.s32.totalorder %s28, 1
      %p134 = por %p132, %p133
      %p136 = scmp.ne.s32.totalorder %s119, %s135
      %p137 = scmp.eq.s32.totalorder %s28, 0
      %p138 = por %p136, %p137
      %p139 = scmp.le.s32.totalorder 1, %s22
      %p140 = scmp.lt.s32.totalorder %s22, 3
      %p141 = pnand %p139, %p140
      %p142 = pneg %p141
      // Predicated region
      $region9: #{tpu_custom_call.1} parent=5 // pred_check
        _
      $region10: #{tpu_custom_call.1} parent=5 // pred_check_branch
        %144 = sbr.rel (%p141) target = $region12
      $region11: #{tpu_custom_call.1} parent=5 // pred_region
        %s145 = ssub.s32 %s22, 1
      $region12: #{tpu_custom_call.1} parent=5 // pred_fallthru
        _
      %p146 = scmp.lt.s32.totalorder %s22, 2
      // Predicated region
      $region13: #{tpu_custom_call.1} parent=5 // pred_check
        %p147 = pneg %p146
      $region14: #{tpu_custom_call.1} parent=5 // pred_check_branch
        %149 = sbr.rel (%p147) target = $region16
      $region15: #{tpu_custom_call.1} parent=5 // pred_region
        // Predicated region
        $region17: #{tpu_custom_call.1} parent=15 // pred_check
          %p150 = pneg %p65
        $region18: #{tpu_custom_call.1} parent=15 // pred_check_branch
          %152 = sbr.rel (%p150) target = $region20
        $region19: #{tpu_custom_call.1} parent=15 // pred_region
          %s153 = sand.u32 %s55, 1
          %s154 = scalar_lea.sflag [#allocation5], %s153
          %s155 = sand.u32 %s55, 1
          %s156 = smul.addr %s155, 8
          %s157 = scalar_lea.vmem [#allocation4], %s156
          %s158 = smul.u32 2, %s31
          %s160 = ssub.s32 128, 128
          %161 = vsyncadd %s154, %s160
          %s162 = smul.addr %s30, 2
          %s163 = sadd.s32 %s158, %s162
          %s164 = smul.addr %s29, 2
          %s165 = sadd.s32 %s163, %s164
          %s166 = smul.addr %s165, 64
          %s167 = scalar_lea.hbm %s1, %s166
          %s169 = sshll.u32 %s157, 4
          %s170 = int_to_ptr.vmem [resolvable:$true] %s169
          %172 = dma.hbm_to_vmem [thread:$0]  %s167, 128, %s170, %s154
        $region20: #{tpu_custom_call.1} parent=15 // pred_fallthru
          _
        // Predicated region
        $region21: #{tpu_custom_call.1} parent=15 // pred_check
          %p173 = pneg %p95
        $region22: #{tpu_custom_call.1} parent=15 // pred_check_branch
          %175 = sbr.rel (%p173) target = $region24
        $region23: #{tpu_custom_call.1} parent=15 // pred_region
          %s176 = sand.u32 %s85, 1
          %s177 = scalar_lea.sflag [#allocation8], %s176
          %s178 = sand.u32 %s85, 1
          %s179 = smul.addr %s178, 8
          %s180 = scalar_lea.vmem [#allocation7], %s179
          %s181 = smul.u32 2, %s31
          %s183 = ssub.s32 128, 128
          %184 = vsyncadd %s177, %s183
          %s185 = smul.addr %s30, 2
          %s186 = sadd.s32 %s181, %s185
          %s187 = smul.addr %s29, 2
          %s188 = sadd.s32 %s186, %s187
          %s189 = smul.addr %s188, 64
          %s190 = scalar_lea.hbm %s2, %s189
          %s192 = sshll.u32 %s180, 4
          %s193 = int_to_ptr.vmem [resolvable:$true] %s192
          %195 = dma.hbm_to_vmem [thread:$0]  %s190, 128, %s193, %s177
        $region24: #{tpu_custom_call.1} parent=15 // pred_fallthru
          _
      $region16: #{tpu_custom_call.1} parent=5 // pred_fallthru
        _
      %p196 = scmp.le.s32.totalorder 1, %s22
      %p197 = scmp.lt.s32.totalorder %s22, 3
      %p198 = pnand %p196, %p197
      %p199 = pneg %p198
      // Predicated region
      $region25: #{tpu_custom_call.1} parent=5 // pred_check
        _
      $region26: #{tpu_custom_call.1} parent=5 // pred_check_branch
        %201 = sbr.rel (%p198) target = $region28
      $region27: #{tpu_custom_call.1} parent=5 // pred_region
        %s202 = ssub.s32 %s22, 1
        %s203 = sand.u32 %s58, 1
        %s204 = scalar_lea.sflag [#allocation5], %s203
        %s205 = sand.u32 %s58, 1
        %s206 = smul.addr %s205, 8
        %s207 = scalar_lea.vmem [#allocation4], %s206
        // Predicated region
        $region29: #{tpu_custom_call.1} parent=27 // pred_check
          %p208 = pneg %p71
        $region30: #{tpu_custom_call.1} parent=27 // pred_check_branch
          %210 = sbr.rel (%p208) target = $region32
        $region31: #{tpu_custom_call.1} parent=27 // pred_region
          %211 = dma.done %s204, 128
        $region32: #{tpu_custom_call.1} parent=27 // pred_fallthru
          _
        %s212 = sand.u32 %s88, 1
        %s213 = scalar_lea.sflag [#allocation8], %s212
        %s214 = sand.u32 %s88, 1
        %s215 = smul.addr %s214, 8
        %s216 = scalar_lea.vmem [#allocation7], %s215
        // Predicated region
        $region33: #{tpu_custom_call.1} parent=27 // pred_check
          %p217 = pneg %p101
        $region34: #{tpu_custom_call.1} parent=27 // pred_check_branch
          %219 = sbr.rel (%p217) target = $region36
        $region35: #{tpu_custom_call.1} parent=27 // pred_region
          %220 = dma.done %s213, 128
        $region36: #{tpu_custom_call.1} parent=27 // pred_fallthru
          _
        %s221 = sand.u32 %s58, 1
        %s222 = scalar_lea.sflag [#allocation5], %s221
        %s223 = sand.u32 %s58, 1
        %s224 = smul.addr %s223, 8
        %s225 = scalar_lea.vmem [#allocation4], %s224
        %p226 = pneg %p71
        %p227 = pneg %p68
        %s228 = sand.u32 %s88, 1
        %s229 = scalar_lea.sflag [#allocation8], %s228
        %s230 = sand.u32 %s88, 1
        %s231 = smul.addr %s230, 8
        %s232 = scalar_lea.vmem [#allocation7], %s231
        %p233 = pneg %p101
        %p234 = pneg %p98
        %p235 = pneg %p131
        %p236 = pneg %p128
        %s237 = sand.u32 %s118, 1
        %s238 = scalar_lea.sflag [#allocation6], %s237
        %s239 = sand.u32 %s118, 1
        %s240 = smul.addr %s239, 8
        %s241 = scalar_lea.vmem [#allocation9], %s240
        %s242 = smul.u32 2, %s34
        %s243 = smul.u32 2, %s34
        %s244 = smul.u32 2, %s34
        %s245 = sld [smem:[#allocation3 + %s32]]
        %v246 = vld [vmem:[%s207] sm:$0xff]
        %v247 = vld [vmem:[%s216] sm:$0xff]
        %v248 = vsub.f32 %v247, %v246
        %v249 = vstv %s245
        %v250 = vmul.f32 %v248, %v249
        %v251 = vadd.f32 %v246, %v250
        %252 = vst [vmem:[%s241] sm:$0xff] %v251
        %s253 = sand.u32 %s118, 1
        %s254 = scalar_lea.sflag [#allocation6], %s253
        %s255 = sand.u32 %s118, 1
        %s256 = smul.addr %s255, 8
        %s257 = scalar_lea.vmem [#allocation9], %s256
        // Predicated region
        $region37: #{tpu_custom_call.1} parent=27 // pred_check
          %p258 = pneg %p128
        $region38: #{tpu_custom_call.1} parent=27 // pred_check_branch
          %260 = sbr.rel (%p258) target = $region40
        $region39: #{tpu_custom_call.1} parent=27 // pred_region
          %s261 = smul.u32 2, %s34
          %s263 = ssub.s32 128, 128
          %264 = vsyncadd %s254, %s263
          %s265 = smul.addr %s33, 2
          %s266 = sadd.s32 %s261, %s265
          %s267 = smul.addr %s32, 2
          %s268 = sadd.s32 %s266, %s267
          %s269 = smul.addr %s268, 64
          %s270 = scalar_lea.hbm %s3, %s269
          %s272 = sshll.u32 %s257, 4
          %s273 = int_to_ptr.vmem [resolvable:$true] %s272
          %275 = dma.vmem_to_hbm [thread:$0]  %s273, 128, %s270, %s254
        $region40: #{tpu_custom_call.1} parent=27 // pred_fallthru
          _
      $region28: #{tpu_custom_call.1} parent=5 // pred_fallthru
        _
      %p276 = scmp.le.s32.totalorder 2, %s22
      // Predicated region
      $region41: #{tpu_custom_call.1} parent=5 // pred_check
        %p277 = pneg %p276
      $region42: #{tpu_custom_call.1} parent=5 // pred_check_branch
        %279 = sbr.rel (%p277) target = $region44
      $region43: #{tpu_custom_call.1} parent=5 // pred_region
        %s280 = ssub.s32 %s22, 2
        // Predicated region
        $region45: #{tpu_custom_call.1} parent=43 // pred_check
          %p281 = pneg %p134
        $region46: #{tpu_custom_call.1} parent=43 // pred_check_branch
          %283 = sbr.rel (%p281) target = $region48
        $region47: #{tpu_custom_call.1} parent=43 // pred_region
          %s284 = sand.u32 %s119, 1
          %s285 = scalar_lea.sflag [#allocation6], %s284
          %s286 = sand.u32 %s119, 1
          %s287 = smul.addr %s286, 8
          %s288 = scalar_lea.vmem [#allocation9], %s287
          %289 = dma.done %s285, 128
        $region48: #{tpu_custom_call.1} parent=43 // pred_fallthru
          _
      $region44: #{tpu_custom_call.1} parent=5 // pred_fallthru
        _
    $region6: #{tpu_custom_call.1} parent=1 // loop_footer
      %s26 = sadd.s32 1, %s22
    $region7: #{tpu_custom_call.1} parent=1 // loop_footer_branch
      %21 = sbr.rel target = $region3
    $region8: #{tpu_custom_call.1} parent=1 // loop_exit
      _
    %290 = vsyncpa [#allocation5], 1
    %s291 = scalar_lea.sflag [#allocation5], 1
    %292 = vsyncpa %s291, 1
    %293 = vsyncpa [#allocation8], 1
    %s294 = scalar_lea.sflag [#allocation8], 1
    %295 = vsyncpa %s294, 1
    %296 = vsyncpa [#allocation6], 1
    %s297 = scalar_lea.sflag [#allocation6], 1
    %298 = vsyncpa %s297, 1

</llo_original>
